<compile_context>
chip_gen: v6e
topology: v6e:2x2x1
jax: 0.10.0
libtpu: 0.0.40
codegen_flags: <defaults>
</compile_context>

<pallas_src>
import jax
import jax.numpy as jnp
from jax.experimental import pallas as pl
from jax.experimental.pallas import tpu as pltpu


def _clip_kernel(x_ref, o_ref):
    # Literal PyTorch op chain, kept in the input dtype:
    #   y = x*2 - 1 ; y = hardtanh(y) = clip(y, -1, 1) ; y = (y + 1) / 2
    x = x_ref[...]
    one = jnp.asarray(1.0, x.dtype)
    two = jnp.asarray(2.0, x.dtype)
    half = jnp.asarray(0.5, x.dtype)
    y = x * two - one
    y = jnp.clip(y, -one, one)
    o_ref[...] = ((y + one) * half).astype(o_ref.dtype)


def _sublane_multiple(itemsize: int) -> int:
    # native packed-vreg sublane granularity per dtype width
    return {4: 8, 2: 16, 1: 32}.get(itemsize, 8)


def _round_up(a: int, m: int) -> int:
    return -(-a // m) * m


def _chip_profile():
    """Return (target_block_bytes, num_tensorcores, vmem_limit_bytes_or_None)."""
    kind = ""
    try:
        kind = jax.devices()[0].device_kind.lower()
    except Exception:
        pass
    if "v7" in kind or "7x" in kind:
        # 2 TCs/chip, ~3.2 TB/s HBM/TC, 64 MiB VMEM (32 MiB scoped default)
        return 8 * 1024 * 1024, 2, 48 * 1024 * 1024
    if "v6" in kind or "trillium" in kind:
        # 1 TC, 32 MiB scoped default -> 4 MiB block * 4 (double-buffered i/o) fits
        return 4 * 1024 * 1024, 1, None
    # v5e / older / unknown: conservative 2 MiB (16 MiB scoped default)
    return 2 * 1024 * 1024, 1, None


def _clip_forward_impl(x):
    orig_shape = x.shape
    dtype = x.dtype
    itemsize = jnp.dtype(dtype).itemsize

    n = 1
    for d in orig_shape:
        n *= int(d)

    # Pick the widest lane-dense slab width (multiple of 128) that divides n.
    lanes = None
    for cand in (1024, 512, 256, 128):
        if n % cand == 0:
            lanes = cand
            break

    if lanes is None or n == 0:
        # Irregular (or empty) element count: XLA's fused elementwise chain is
        # already at HBM roofline; the pad + kernel + tail-slice path would be
        # ~3x the HBM traffic, so just fall back.
        one = jnp.asarray(1.0, dtype)
        two = jnp.asarray(2.0, dtype)
        half = jnp.asarray(0.5, dtype)
        return ((jnp.clip(x * two - one, -one, one) + one) * half).astype(dtype)

    target_block_bytes, num_cores, vmem_limit = _chip_profile()

    slab = x.reshape(-1, lanes)          # (rows, lanes) lane-dense layout
    rows = slab.shape[0]
    sub = _sublane_multiple(itemsize)

    # ~target_block_bytes per block, rounded down to the sublane granularity.
    target_rows = max(sub, (target_block_bytes // (lanes * itemsize)) // sub * sub)

    if rows <= target_rows:
        # Single full-extent block (always legal); no forced split on 1-TC chips.
        tile_rows = rows
    else:
        tile_rows = target_rows          # sublane-aligned; ragged last block OK

    # v7x megacore: prefer an even grid of near-equal, sublane-aligned blocks so
    # both TensorCores' HBM engines stay busy to the end. Never grows the block.
    if num_cores >= 2 and rows > 2 * sub:
        g = pl.cdiv(rows, tile_rows)
        if g % 2 == 1:
            cand = _round_up(pl.cdiv(rows, g + 1), sub)
            if sub <= cand < rows and pl.cdiv(rows, cand) % 2 == 0:
                tile_rows = cand

    grid = (pl.cdiv(rows, tile_rows),)

    out = pl.pallas_call(
        _clip_kernel,
        out_shape=jax.ShapeDtypeStruct((rows, lanes), dtype),
        grid_spec=pltpu.PrefetchScalarGridSpec(
            num_scalar_prefetch=0,
            grid=grid,
            in_specs=[pl.BlockSpec((tile_rows, lanes), lambda i: (i, 0))],
            out_specs=pl.BlockSpec((tile_rows, lanes), lambda i: (i, 0)),
        ),
        compiler_params=pltpu.CompilerParams(
            dimension_semantics=("parallel",),
            vmem_limit_bytes=vmem_limit,
        ),
        cost_estimate=pl.CostEstimate(
            flops=5 * n,
            transcendentals=0,
            bytes_accessed=2 * n * itemsize,
        ),
    )(slab)

    return out.reshape(orig_shape)


# jit so the reshapes are zero-copy and the CostEstimate informs XLA scheduling.
clip_forward = jax.jit(_clip_forward_impl)


if __name__ == "__main__":
    key = jax.random.PRNGKey(0)
    # NCHW input, consistent with PyTorch conv-style modules
    x = jax.random.normal(key, (2, 4, 16, 16), dtype=jnp.float32)

    y = clip_forward(x)
    jax.block_until_ready(y)

    # reference check in plain JAX (the literal PyTorch op sequence)
    ref = (jnp.clip(x * 2.0 - 1.0, -1.0, 1.0) + 1.0) / 2.0
    assert y.shape == x.shape
    assert y.dtype == x.dtype
    assert jnp.allclose(y, ref, atol=1e-6)

    print("KERNEL_OK")
</pallas_src>

<mosaic_0001>
module attributes {stable_mosaic.version = 11 : i64} {
  func.func @_clip_kernel(%arg0: i32, %arg1: memref<2x1024xf32, #tpu.memory_space<vmem>>, %arg2: memref<2x1024xf32, #tpu.memory_space<vmem>>) attributes {dimension_semantics = [#tpu.dimension_semantics<parallel>], iteration_bounds = array<i64: 1>, scalar_prefetch = 0 : i64, scratch_operands = 0 : i64, tpu.core_type = #tpu.core_type<tc>, window_params = [{transform_indices = @transform_0, window_bounds = array<i64: 2, 1024>}, {transform_indices = @transform_1, window_bounds = array<i64: 2, 1024>}]} {
    %c0 = arith.constant 0 : index
    %c0_0 = arith.constant 0 : index
    %0 = vector.load %arg1[%c0, %c0_0] : memref<2x1024xf32, #tpu.memory_space<vmem>>, vector<2x1024xf32>
    %cst = arith.constant 2.000000e+00 : f32
    %1 = vector.broadcast %cst : f32 to vector<2x1024xf32>
    %2 = arith.mulf %0, %1 : vector<2x1024xf32>
    %cst_1 = arith.constant 1.000000e+00 : f32
    %3 = vector.broadcast %cst_1 : f32 to vector<2x1024xf32>
    %4 = arith.subf %2, %3 : vector<2x1024xf32>
    %cst_2 = arith.constant 0.000000e+00 : f32
    %cst_3 = arith.constant 1.000000e+00 : f32
    %5 = arith.subf %cst_2, %cst_3 : f32
    %cst_4 = arith.constant 1.000000e+00 : f32
    %6 = vector.broadcast %5 : f32 to vector<2x1024xf32>
    %7 = arith.maximumf %6, %4 : vector<2x1024xf32>
    %8 = vector.broadcast %cst_4 : f32 to vector<2x1024xf32>
    %9 = arith.minimumf %8, %7 : vector<2x1024xf32>
    %cst_5 = arith.constant 1.000000e+00 : f32
    %10 = vector.broadcast %cst_5 : f32 to vector<2x1024xf32>
    %11 = arith.addf %9, %10 : vector<2x1024xf32>
    %cst_6 = arith.constant 5.000000e-01 : f32
    %12 = vector.broadcast %cst_6 : f32 to vector<2x1024xf32>
    %13 = arith.mulf %11, %12 : vector<2x1024xf32>
    %c0_7 = arith.constant 0 : index
    %c0_8 = arith.constant 0 : index
    %14 = vector.load %arg2[%c0_7, %c0_8] : memref<2x1024xf32, #tpu.memory_space<vmem>>, vector<2x1024xf32>
    tpu.vector_store %arg2[%c0_7, %c0_8], %13 {strides = array<i32>} : memref<2x1024xf32, #tpu.memory_space<vmem>>, vector<2x1024xf32>,
    return
  }
  func.func @transform_0(%arg0: i32) -> (i32, i32) {
    %c0_i32 = arith.constant 0 : i32
    %c0_i32_0 = arith.constant 0 : i32
    return %arg0, %c0_i32 : i32, i32
  }
  func.func @transform_1(%arg0: i32) -> (i32, i32) {
    %c0_i32 = arith.constant 0 : i32
    %c0_i32_0 = arith.constant 0 : i32
    return %arg0, %c0_i32 : i32, i32
  }
}

</mosaic_0001>

<llo_original>
// kernel: _clip_forward_impl.1
$region0: #{_clip_forward_impl.1}
  #allocation0 [shape = 'u32[]', space=smem, size = 0x4, offset = 0x4, fixed_abs, tag = 'smem constant byte address 0x4 - core index']
  #allocation1 [shape = 'u32[144,128]{1,0:T(1,128)}', space=vmem, size = 0x12000, scoped, tag = 'internal scratch']
  %s0 = inlined_call_operand.vmem [shape: f32[2,1024], index: 0, kind: input, shape index: {}]
  %s1 = inlined_call_operand.vmem [shape: f32[2,1024], index: 1, kind: output, shape index: {}]
  %s2 = sld [smem:[#allocation0]]
  $region14: #{_clip_forward_impl.1} parent=0
    _
  %s4 = ssub.s32 1, %s2
  %s5 = scalar_select 0, %s4, %s2
  // Predicated region
  $region2: #{_clip_forward_impl.1} parent=0 // pred_check
    _
  $region3: #{_clip_forward_impl.1} parent=0 // pred_check_branch
    %7 = sbr.rel (0) target = $region5
  $region4: #{_clip_forward_impl.1} parent=0 // pred_region
    _
  $region5: #{_clip_forward_impl.1} parent=0 // pred_fallthru
    _
  %v8 = vld [vmem:[%s0] sm:$0xff]
  %v9 = vld [vmem:[%s0 + $0x8] sm:$0xff]
  %v10 = vmul.f32 %v8, 2.0
  %v11 = vmul.f32 %v9, 2.0
  %v12 = vsub.f32 %v10, 1.0
  %v13 = vsub.f32 %v11, 1.0
  %v14 = vmax.f32 %v12, -1.0
  %v15 = vmax.f32 %v13, -1.0
  %v16 = vmin.f32 %v14, 1.0
  %v17 = vmin.f32 %v15, 1.0
  %v18 = vadd.f32 %v16, 1.0
  %v19 = vadd.f32 %v17, 1.0
  %v20 = vmul.f32 %v18, 0.5
  %v21 = vmul.f32 %v19, 0.5
  %22 = vst [vmem:[%s1] sm:$0xff] %v20
  %23 = vst [vmem:[%s1 + $0x8] sm:$0xff] %v21
  // Predicated region
  $region6: #{_clip_forward_impl.1} parent=0 // pred_check
    _
  $region7: #{_clip_forward_impl.1} parent=0 // pred_check_branch
    %25 = sbr.rel (0) target = $region9
  $region8: #{_clip_forward_impl.1} parent=0 // pred_region
    _
  $region9: #{_clip_forward_impl.1} parent=0 // pred_fallthru
    _
  // Predicated region
  $region10: #{_clip_forward_impl.1} parent=0 // pred_check
    _
  $region11: #{_clip_forward_impl.1} parent=0 // pred_check_branch
    %27 = sbr.rel (0) target = $region13
  $region12: #{_clip_forward_impl.1} parent=0 // pred_region
    _
  $region13: #{_clip_forward_impl.1} parent=0 // pred_fallthru
    _

</llo_original>
